<compile_context>
chip_gen: v7x
topology: tpu7x:2x2x1
jax: 0.10.0
libtpu: 0.0.40
codegen_flags: <defaults>
</compile_context>

<pallas_src>
import jax
import jax.numpy as jnp
from jax import lax
from jax.experimental import pallas as pl
from jax.experimental.pallas import tpu as pltpu


# ------------------------------------------------------------------
# Kernel bodies
# ------------------------------------------------------------------
def _se_kernel_cfirst(x_ref, w1t_ref, b1_ref, w2t_ref, b2_ref, o_ref):
    """x laid out (Bt, C, HW): spatial dim on the lane axis."""
    x = x_ref[...]                                                  # (Bt, C, HW)
    inv_hw = jnp.float32(1.0 / x.shape[-1])
    pooled = jnp.sum(x, axis=-1, dtype=jnp.float32) * inv_hw        # (Bt, C)
    h = jnp.dot(pooled, w1t_ref[...],
                preferred_element_type=jnp.float32,
                precision=lax.Precision.HIGHEST)                    # (Bt, Cs)
    h = jnp.maximum(h + b1_ref[...], 0.0)
    s = jnp.dot(h, w2t_ref[...],
                preferred_element_type=jnp.float32,
                precision=lax.Precision.HIGHEST)                    # (Bt, C)
    s = jax.nn.sigmoid(s + b2_ref[...])
    o_ref[...] = x * s.astype(x.dtype)[:, :, None]


def _se_kernel_clast(x_ref, w1t_ref, b1_ref, w2t_ref, b2_ref, o_ref):
    """x laid out (Bt, HW, C): channels on the lane axis (lane-dense stores
    when HW is not a multiple of 128 but C is)."""
    x = x_ref[...]                                                  # (Bt, HW, C)
    inv_hw = jnp.float32(1.0 / x.shape[1])
    pooled = jnp.sum(x, axis=1, dtype=jnp.float32) * inv_hw         # (Bt, C)
    h = jnp.dot(pooled, w1t_ref[...],
                preferred_element_type=jnp.float32,
                precision=lax.Precision.HIGHEST)                    # (Bt, Cs)
    h = jnp.maximum(h + b1_ref[...], 0.0)
    s = jnp.dot(h, w2t_ref[...],
                preferred_element_type=jnp.float32,
                precision=lax.Precision.HIGHEST)                    # (Bt, C)
    s = jax.nn.sigmoid(s + b2_ref[...])
    o_ref[...] = x * s.astype(x.dtype)[:, None, :]


# ------------------------------------------------------------------
# Tiling policy
# ------------------------------------------------------------------
# Per-block slab budget: with in + out double-buffered this keeps the pipelined
# footprint around 4 * 6 MiB = 24 MiB, which fits v7x's 64 MiB VMEM and stays
# inside the explicit limit we set below on v5e/v6e as well.
_SLAB_BUDGET_BYTES = 6 << 20
_VMEM_LIMIT_BYTES = 48 << 20   # > 32 MiB scoped default, < v7x's 64 MiB physical


def _choose_block_batch(batch, per_sample_bytes):
    """Largest divisor of `batch` whose slab fits the VMEM budget, preferring
    a >= 2-step grid so both v7x TensorCores get work."""
    cap = max(1, _SLAB_BUDGET_BYTES // max(per_sample_bytes, 1))
    divisors = [d for d in range(1, batch + 1) if batch % d == 0]
    fits = [d for d in divisors if d <= cap] or [1]
    pref = [d for d in fits if batch // d >= 2]
    return max(pref) if pref else max(fits)


# ------------------------------------------------------------------
# Wrapper
# ------------------------------------------------------------------
def se_module(x, w1, b1, w2, b2):
    """x: (B, C, H, W); w1: (Cs, C), b1: (Cs,), w2: (C, Cs), b2: (C,).

    Weights follow the PyTorch nn.Linear convention (out_features, in_features),
    i.e. y = x @ W.T + b.
    """
    B, C, H, W = x.shape
    Cs = w1.shape[0]
    HW = H * W
    itemsize = jnp.dtype(x.dtype).itemsize

    Bt = _choose_block_batch(B, C * HW * itemsize)
    grid = (B // Bt,)
    # TODO(synk): add a two-pass (pool-then-gate) fallback for samples whose
    # single (C, HW) slab exceeds the VMEM budget (relevant on v7x's 64 MiB).

    # Pre-transpose parameters so the kernel computes y = pooled @ W.T + b
    # with no in-kernel transposes.
    w1t = jnp.transpose(w1)          # (C, Cs)
    b1r = b1.reshape(1, Cs)
    w2t = jnp.transpose(w2)          # (Cs, C)
    b2r = b2.reshape(1, C)

    # Layout choice: put channels on the lane axis only when the spatial dim is
    # lane-sparse (HW % 128 != 0) and channels are lane-dense (C % 128 == 0).
    channels_last = (HW % 128 != 0) and (C % 128 == 0)
    if channels_last:
        x_in = jnp.transpose(x.reshape(B, C, HW), (0, 2, 1))   # (B, HW, C)
        kernel = _se_kernel_clast
        blk = (Bt, HW, C)
    else:
        x_in = x.reshape(B, C, HW)                             # (B, C, HW)
        kernel = _se_kernel_cfirst
        blk = (Bt, C, HW)

    out = pl.pallas_call(
        kernel,
        out_shape=jax.ShapeDtypeStruct(x_in.shape, x.dtype),
        grid_spec=pltpu.PrefetchScalarGridSpec(
            num_scalar_prefetch=0,
            grid=grid,
            in_specs=[
                pl.BlockSpec(blk, lambda b: (b, 0, 0)),
                pl.BlockSpec((C, Cs), lambda b: (0, 0)),
                pl.BlockSpec((1, Cs), lambda b: (0, 0)),
                pl.BlockSpec((Cs, C), lambda b: (0, 0)),
                pl.BlockSpec((1, C), lambda b: (0, 0)),
            ],
            out_specs=pl.BlockSpec(blk, lambda b: (b, 0, 0)),
        ),
        compiler_params=pltpu.CompilerParams(
            dimension_semantics=("parallel",),
            vmem_limit_bytes=_VMEM_LIMIT_BYTES,
        ),
    )(x_in, w1t, b1r, w2t, b2r)

    if channels_last:
        out = jnp.transpose(out, (0, 2, 1))
    return out.reshape(B, C, H, W)


# ------------------------------------------------------------------
# Pure-JAX reference matching the PyTorch forward
# ------------------------------------------------------------------
def se_module_ref(x, w1, b1, w2, b2):
    pooled = jnp.mean(x, axis=(2, 3))                                  # (B, C)
    h = jnp.maximum(
        jnp.dot(pooled, w1.T, precision=lax.Precision.HIGHEST) + b1, 0.0)
    s = jax.nn.sigmoid(
        jnp.dot(h, w2.T, precision=lax.Precision.HIGHEST) + b2)        # (B, C)
    return x * s[:, :, None, None]


# ------------------------------------------------------------------
# Demo / correctness check
# ------------------------------------------------------------------
def _run_case(key, B, C, H, W, squeeze_ratio, dtype=jnp.float32):
    Cs = max(1, int(C * squeeze_ratio))
    kx, k1, k2, k3, k4 = jax.random.split(key, 5)
    x = jax.random.normal(kx, (B, C, H, W), dtype=dtype)
    w1 = jax.random.normal(k1, (Cs, C), dtype=dtype) * 0.5
    b1 = jax.random.normal(k2, (Cs,), dtype=dtype) * 0.1
    w2 = jax.random.normal(k3, (C, Cs), dtype=dtype) * 0.5
    b2 = jax.random.normal(k4, (C,), dtype=dtype) * 0.1

    out = jax.block_until_ready(se_module(x, w1, b1, w2, b2))
    ref = se_module_ref(x, w1, b1, w2, b2)
    assert out.shape == (B, C, H, W)
    assert jnp.allclose(out, ref, atol=2e-5, rtol=2e-5), "mismatch vs reference"


if __name__ == "__main__":
    key = jax.random.PRNGKey(0)
    k1, k2 = jax.random.split(key)
    # Spec-sized case: channels-first path (HW = 256 is lane-aligned), grid of 2.
    _run_case(k1, B=2, C=4, H=16, W=16, squeeze_ratio=1.0)
    # Exercises Bt > 1 batching and the lane-dense channels-last path
    # (HW = 49 is not a multiple of 128, C = 128 is).
    _run_case(k2, B=8, C=128, H=7, W=7, squeeze_ratio=0.25)
    print("KERNEL_OK")
</pallas_src>

<mosaic_0001>
module attributes {stable_mosaic.version = 11 : i64} {
  func.func @_se_kernel_cfirst(%arg0: i32, %arg1: memref<1x4x256xf32, #tpu.memory_space<vmem>>, %arg2: memref<4x4xf32, #tpu.memory_space<vmem>>, %arg3: memref<1x4xf32, #tpu.memory_space<vmem>>, %arg4: memref<4x4xf32, #tpu.memory_space<vmem>>, %arg5: memref<1x4xf32, #tpu.memory_space<vmem>>, %arg6: memref<1x4x256xf32, #tpu.memory_space<vmem>>) attributes {dimension_semantics = [#tpu.dimension_semantics<parallel>], iteration_bounds = array<i64: 2>, scalar_prefetch = 0 : i64, scratch_operands = 0 : i64, tpu.core_type = #tpu.core_type<tc>, window_params = [{transform_indices = @transform_0, window_bounds = array<i64: 1, 4, 256>}, {pipeline_mode = #tpu.pipeline_mode<synchronous>, transform_indices = @transform_1, window_bounds = array<i64: 4, 4>}, {pipeline_mode = #tpu.pipeline_mode<synchronous>, transform_indices = @transform_2, window_bounds = array<i64: 1, 4>}, {pipeline_mode = #tpu.pipeline_mode<synchronous>, transform_indices = @transform_3, window_bounds = array<i64: 4, 4>}, {pipeline_mode = #tpu.pipeline_mode<synchronous>, transform_indices = @transform_4, window_bounds = array<i64: 1, 4>}, {transform_indices = @transform_5, window_bounds = array<i64: 1, 4, 256>}]} {
    %c0 = arith.constant 0 : index
    %c0_0 = arith.constant 0 : index
    %c0_1 = arith.constant 0 : index
    %0 = vector.load %arg1[%c0, %c0_0, %c0_1] : memref<1x4x256xf32, #tpu.memory_space<vmem>>, vector<1x4x256xf32>
    %cst = arith.constant dense<0.000000e+00> : vector<1x4xf32>
    %1 = vector.multi_reduction <add>, %0, %cst [2] : vector<1x4x256xf32> to vector<1x4xf32>
    %cst_2 = arith.constant 3.906250e-03 : f32
    %2 = vector.broadcast %cst_2 : f32 to vector<1x4xf32>
    %3 = arith.mulf %1, %2 : vector<1x4xf32>
    %c0_3 = arith.constant 0 : index
    %c0_4 = arith.constant 0 : index
    %4 = vector.load %arg2[%c0_3, %c0_4] : memref<4x4xf32, #tpu.memory_space<vmem>>, vector<4x4xf32>
    %cst_5 = arith.constant dense<0.000000e+00> : vector<1x4xf32>
    %5 = tpu.matmul %3, %4, %cst_5 {dimension_numbers = #tpu.dot_dimension_numbers<[1], [0], [0], [1], [0, 0, 1, 1], [], []>, precision = #tpu.contract_precision<fp32>} : vector<1x4xf32>, vector<4x4xf32>, vector<1x4xf32> -> vector<1x4xf32>
    %c0_6 = arith.constant 0 : index
    %c0_7 = arith.constant 0 : index
    %6 = vector.load %arg3[%c0_6, %c0_7] : memref<1x4xf32, #tpu.memory_space<vmem>>, vector<1x4xf32>
    %7 = arith.addf %5, %6 : vector<1x4xf32>
    %cst_8 = arith.constant 0.000000e+00 : f32
    %8 = vector.broadcast %cst_8 : f32 to vector<1x4xf32>
    %9 = arith.maximumf %7, %8 : vector<1x4xf32>
    %c0_9 = arith.constant 0 : index
    %c0_10 = arith.constant 0 : index
    %10 = vector.load %arg4[%c0_9, %c0_10] : memref<4x4xf32, #tpu.memory_space<vmem>>, vector<4x4xf32>
    %cst_11 = arith.constant dense<0.000000e+00> : vector<1x4xf32>
    %11 = tpu.matmul %9, %10, %cst_11 {dimension_numbers = #tpu.dot_dimension_numbers<[1], [0], [0], [1], [0, 0, 1, 1], [], []>, precision = #tpu.contract_precision<fp32>} : vector<1x4xf32>, vector<4x4xf32>, vector<1x4xf32> -> vector<1x4xf32>
    %c0_12 = arith.constant 0 : index
    %c0_13 = arith.constant 0 : index
    %12 = vector.load %arg5[%c0_12, %c0_13] : memref<1x4xf32, #tpu.memory_space<vmem>>, vector<1x4xf32>
    %13 = arith.addf %11, %12 : vector<1x4xf32>
    %14 = arith.negf %13 : vector<1x4xf32>
    %15 = math.exp %14 : vector<1x4xf32>
    %cst_14 = arith.constant 1.000000e+00 : f32
    %16 = vector.broadcast %cst_14 : f32 to vector<1x4xf32>
    %17 = arith.addf %16, %15 : vector<1x4xf32>
    %18 = arith.divf %16, %17 : vector<1x4xf32>
    %19 = vector.shape_cast %18 : vector<1x4xf32> to vector<1x4x1xf32>
    %20 = vector.broadcast %19 : vector<1x4x1xf32> to vector<1x4x256xf32>
    %21 = arith.mulf %0, %20 : vector<1x4x256xf32>
    %c0_15 = arith.constant 0 : index
    %c0_16 = arith.constant 0 : index
    %c0_17 = arith.constant 0 : index
    %22 = vector.load %arg6[%c0_15, %c0_16, %c0_17] : memref<1x4x256xf32, #tpu.memory_space<vmem>>, vector<1x4x256xf32>
    tpu.vector_store %arg6[%c0_15, %c0_16, %c0_17], %21 {strides = array<i32>} : memref<1x4x256xf32, #tpu.memory_space<vmem>>, vector<1x4x256xf32>,
    return
  }
  func.func @transform_0(%arg0: i32) -> (i32, i32, i32) {
    %c0_i32 = arith.constant 0 : i32
    %c0_i32_0 = arith.constant 0 : i32
    %c0_i32_1 = arith.constant 0 : i32
    return %arg0, %c0_i32, %c0_i32_0 : i32, i32, i32
  }
  func.func @transform_1(%arg0: i32) -> (i32, i32) {
    %c0_i32 = arith.constant 0 : i32
    %c0_i32_0 = arith.constant 0 : i32
    %c0_i32_1 = arith.constant 0 : i32
    return %c0_i32, %c0_i32_0 : i32, i32
  }
  func.func @transform_2(%arg0: i32) -> (i32, i32) {
    %c0_i32 = arith.constant 0 : i32
    %c0_i32_0 = arith.constant 0 : i32
    %c0_i32_1 = arith.constant 0 : i32
    return %c0_i32, %c0_i32_0 : i32, i32
  }
  func.func @transform_3(%arg0: i32) -> (i32, i32) {
    %c0_i32 = arith.constant 0 : i32
    %c0_i32_0 = arith.constant 0 : i32
    %c0_i32_1 = arith.constant 0 : i32
    return %c0_i32, %c0_i32_0 : i32, i32
  }
  func.func @transform_4(%arg0: i32) -> (i32, i32) {
    %c0_i32 = arith.constant 0 : i32
    %c0_i32_0 = arith.constant 0 : i32
    %c0_i32_1 = arith.constant 0 : i32
    return %c0_i32, %c0_i32_0 : i32, i32
  }
  func.func @transform_5(%arg0: i32) -> (i32, i32, i32) {
    %c0_i32 = arith.constant 0 : i32
    %c0_i32_0 = arith.constant 0 : i32
    %c0_i32_1 = arith.constant 0 : i32
    return %arg0, %c0_i32, %c0_i32_0 : i32, i32, i32
  }
}

</mosaic_0001>

<llo_original>
// kernel: tpu_custom_call.1
$region0: #{tpu_custom_call.1}
  #allocation0 [shape = 'u32[]', space=smem, size = 0x4, offset = 0x4, fixed_abs, tag = 'smem constant byte address 0x4 - core index']
  #allocation1 [shape = 'u32[144,128]{1,0:T(1,128)}', space=vmem, size = 0x12000, scoped, tag = 'internal scratch']
  %s0 = inlined_call_operand.hbm [shape: f32[2,4,256], index: 0, kind: input, shape index: {}]
  %s1 = inlined_call_operand.hbm [shape: f32[4,4], index: 1, kind: input, shape index: {}]
  %s2 = inlined_call_operand.vmem [shape: f32[1,4], index: 2, kind: input, shape index: {}]
  %s3 = inlined_call_operand.vmem [shape: f32[4,4], index: 3, kind: input, shape index: {}]
  %s4 = inlined_call_operand.vmem [shape: f32[1,4], index: 4, kind: input, shape index: {}]
  %s5 = inlined_call_operand.hbm [shape: f32[2,4,256], index: 5, kind: output, shape index: {}]
  %s6 = sld [smem:[#allocation0]]
  $region61: #{tpu_custom_call.1} parent=0
    _
  %s8 = ssub.s32 1, %s6
  %s9 = scalar_select 0, %s8, %s6
  $region1: #{tpu_custom_call.1} parent=0
    #allocation2 [shape = 'u8[8192]{0}', space=vmem, size = 0x2000, scoped, tag = 'input window, operand 0']
    #allocation3 [shape = 's32[2]{0}', space=sflag, size = 0x8, scoped, tag = 'scoped memory for tpu_custom_call.1']
    #allocation4 [shape = 's32[2]{0}', space=sflag, size = 0x8, scoped, tag = 'scoped memory for tpu_custom_call.1']
    #allocation5 [shape = 'u8[2048]{0}', space=vmem, size = 0x800, scoped, tag = 'input window, operand 1, single buffered']
    #allocation6 [shape = 's32[1]{0}', space=sflag, size = 0x4, scoped, tag = 'scoped memory for tpu_custom_call.1']
    #allocation7 [shape = 'u8[8192]{0}', space=vmem, size = 0x2000, scoped, tag = 'output window, operand 0']
    %10 = vsyncpa [#allocation3], 0
    %s11 = scalar_lea.sflag [#allocation3], 1
    %12 = vsyncpa %s11, 0
    %13 = vsyncpa [#allocation6], 0
    %14 = vsyncpa [#allocation4], 0
    %s15 = scalar_lea.sflag [#allocation4], 1
    %16 = vsyncpa %s15, 0
    loop: start=0, step=1, limit=4
    $region2: #{tpu_custom_call.1} parent=1 // loop_pre_header
      _
    $region3: #{tpu_custom_call.1} parent=1 // loop_header
      %s18 = sphi 0, %s22
      %p19 = scmp.ge.s32.totalorder %s18, 4
      %s28 = sphi 0, %s30
      %s31 = sphi 0, %s28
      %s32 = sphi 0, %s31
      %s48 = sphi 0, %s32
      %s52 = sphi 0, %s52
      %s54 = sphi 0, %s52
      %s55 = sphi 0, %s54
      %s69 = sphi 0, %s55
      %s73 = sphi 0, %s73
      %s75 = sphi 0, %s73
      %s76 = sphi 0, %s75
      %s90 = sphi 0, %s76
      %s94 = sphi 0, %s94
      %s96 = sphi 0, %s94
      %s97 = sphi 0, %s96
      %s111 = sphi 0, %s97
      %s115 = sphi 0, %s115
      %s117 = sphi 0, %s115
      %s118 = sphi 0, %s117
      %s132 = sphi 0, %s118
      %s138 = sphi 0, %s140
      %s141 = sphi 0, %s138
      %s142 = sphi 0, %s141
      %s158 = sphi 0, %s142
    $region4: #{tpu_custom_call.1} parent=1 // loop_header_branch
      %21 = sbr.rel (%p19) target = $region8
    $region5: #{tpu_custom_call.1} parent=1 // loop_body
      %s23 = ssub.s32 %s18, 1
      %s24 = ssub.s32 %s18, 2
      %s25 = sadd.s32 %s18, 1
      %s26 = ssub.s32 %s18, %s25
      %p27 = scmp.eq.s32.totalorder %s26, 0
      %s29 = sadd.s32 %s28, 1
      %s30 = scalar_select %p27, %s28, %s29
      %p33 = pneg %p27
      %p34 = scmp.eq.s32.totalorder %s18, 1
      %p35 = por %p33, %p34
      %p36 = scmp.ne.s32.totalorder %s28, %s31
      %p37 = scmp.eq.s32.totalorder %s18, 0
      %p38 = por %p36, %p37
      %p39 = scmp.ne.s32.totalorder %s28, %s31
      %p40 = scmp.eq.s32.totalorder %s23, 1
      %p41 = por %p39, %p40
      %p42 = scmp.ne.s32.totalorder %s31, %s32
      %p43 = scmp.eq.s32.totalorder %s23, 0
      %p44 = por %p42, %p43
      %p45 = scmp.ne.s32.totalorder %s31, %s32
      %p46 = scmp.eq.s32.totalorder %s24, 1
      %p47 = por %p45, %p46
      %p49 = scmp.ne.s32.totalorder %s32, %s48
      %p50 = scmp.eq.s32.totalorder %s24, 0
      %p51 = por %p49, %p50
      %s53 = sadd.s32 %s52, 1
      %p56 = scmp.eq.s32.totalorder %s18, 1
      %p57 = scmp.ne.s32.totalorder %s52, %s54
      %p58 = scmp.eq.s32.totalorder %s18, 0
      %p59 = por %p57, %p58
      %p60 = scmp.ne.s32.totalorder %s52, %s54
      %p61 = scmp.eq.s32.totalorder %s23, 1
      %p62 = por %p60, %p61
      %p63 = scmp.ne.s32.totalorder %s54, %s55
      %p64 = scmp.eq.s32.totalorder %s23, 0
      %p65 = por %p63, %p64
      %p66 = scmp.ne.s32.totalorder %s54, %s55
      %p67 = scmp.eq.s32.totalorder %s24, 1
      %p68 = por %p66, %p67
      %p70 = scmp.ne.s32.totalorder %s55, %s69
      %p71 = scmp.eq.s32.totalorder %s24, 0
      %p72 = por %p70, %p71
      %s74 = sadd.s32 %s73, 1
      %p77 = scmp.eq.s32.totalorder %s18, 1
      %p78 = scmp.ne.s32.totalorder %s73, %s75
      %p79 = scmp.eq.s32.totalorder %s18, 0
      %p80 = por %p78, %p79
      %p81 = scmp.ne.s32.totalorder %s73, %s75
      %p82 = scmp.eq.s32.totalorder %s23, 1
      %p83 = por %p81, %p82
      %p84 = scmp.ne.s32.totalorder %s75, %s76
      %p85 = scmp.eq.s32.totalorder %s23, 0
      %p86 = por %p84, %p85
      %p87 = scmp.ne.s32.totalorder %s75, %s76
      %p88 = scmp.eq.s32.totalorder %s24, 1
      %p89 = por %p87, %p88
      %p91 = scmp.ne.s32.totalorder %s76, %s90
      %p92 = scmp.eq.s32.totalorder %s24, 0
      %p93 = por %p91, %p92
      %s95 = sadd.s32 %s94, 1
      %p98 = scmp.eq.s32.totalorder %s18, 1
      %p99 = scmp.ne.s32.totalorder %s94, %s96
      %p100 = scmp.eq.s32.totalorder %s18, 0
      %p101 = por %p99, %p100
      %p102 = scmp.ne.s32.totalorder %s94, %s96
      %p103 = scmp.eq.s32.totalorder %s23, 1
      %p104 = por %p102, %p103
      %p105 = scmp.ne.s32.totalorder %s96, %s97
      %p106 = scmp.eq.s32.totalorder %s23, 0
      %p107 = por %p105, %p106
      %p108 = scmp.ne.s32.totalorder %s96, %s97
      %p109 = scmp.eq.s32.totalorder %s24, 1
      %p110 = por %p108, %p109
      %p112 = scmp.ne.s32.totalorder %s97, %s111
      %p113 = scmp.eq.s32.totalorder %s24, 0
      %p114 = por %p112, %p113
      %s116 = sadd.s32 %s115, 1
      %p119 = scmp.eq.s32.totalorder %s18, 1
      %p120 = scmp.ne.s32.totalorder %s115, %s117
      %p121 = scmp.eq.s32.totalorder %s18, 0
      %p122 = por %p120, %p121
      %p123 = scmp.ne.s32.totalorder %s115, %s117
      %p124 = scmp.eq.s32.totalorder %s23, 1
      %p125 = por %p123, %p124
      %p126 = scmp.ne.s32.totalorder %s117, %s118
      %p127 = scmp.eq.s32.totalorder %s23, 0
      %p128 = por %p126, %p127
      %p129 = scmp.ne.s32.totalorder %s117, %s118
      %p130 = scmp.eq.s32.totalorder %s24, 1
      %p131 = por %p129, %p130
      %p133 = scmp.ne.s32.totalorder %s118, %s132
      %p134 = scmp.eq.s32.totalorder %s24, 0
      %p135 = por %p133, %p134
      %s136 = ssub.s32 %s18, %s25
      %p137 = scmp.eq.s32.totalorder %s136, 0
      %s139 = sadd.s32 %s138, 1
      %s140 = scalar_select %p137, %s138, %s139
      %p143 = pneg %p137
      %p144 = scmp.eq.s32.totalorder %s18, 1
      %p145 = por %p143, %p144
      %p146 = scmp.ne.s32.totalorder %s138, %s141
      %p147 = scmp.eq.s32.totalorder %s18, 0
      %p148 = por %p146, %p147
      %p149 = scmp.ne.s32.totalorder %s138, %s141
      %p150 = scmp.eq.s32.totalorder %s23, 1
      %p151 = por %p149, %p150
      %p152 = scmp.ne.s32.totalorder %s141, %s142
      %p153 = scmp.eq.s32.totalorder %s23, 0
      %p154 = por %p152, %p153
      %p155 = scmp.ne.s32.totalorder %s141, %s142
      %p156 = scmp.eq.s32.totalorder %s24, 1
      %p157 = por %p155, %p156
      %p159 = scmp.ne.s32.totalorder %s142, %s158
      %p160 = scmp.eq.s32.totalorder %s24, 0
      %p161 = por %p159, %p160
      %p162 = scmp.le.s32.totalorder 1, %s18
      %p163 = scmp.lt.s32.totalorder %s18, 3
      %p164 = pnand %p162, %p163
      %p165 = pneg %p164
      // Predicated region
      $region9: #{tpu_custom_call.1} parent=5 // pred_check
        _
      $region10: #{tpu_custom_call.1} parent=5 // pred_check_branch
        %167 = sbr.rel (%p164) target = $region12
      $region11: #{tpu_custom_call.1} parent=5 // pred_region
        %s168 = ssub.s32 %s18, 1
        // Predicated region
        $region13: #{tpu_custom_call.1} parent=11 // pred_check
          %p169 = pneg %p65
        $region14: #{tpu_custom_call.1} parent=11 // pred_check_branch
          %171 = sbr.rel (%p169) target = $region16
        $region15: #{tpu_custom_call.1} parent=11 // pred_region
          %s173 = ssub.s32 64, 64
          %174 = vsyncadd [#allocation6], %s173
          %s176 = sshll.u32 [#allocation5], 4
          %s177 = int_to_ptr.vmem [resolvable:$true] %s176
          %179 = dma.hbm_to_vmem [thread:$0]  %s1, 64, %s177, [#allocation6]
        $region16: #{tpu_custom_call.1} parent=11 // pred_fallthru
          _
        // Predicated region
        $region17: #{tpu_custom_call.1} parent=11 // pred_check
          %p180 = pneg %p86
        $region18: #{tpu_custom_call.1} parent=11 // pred_check_branch
          %182 = sbr.rel (%p180) target = $region20
        $region19: #{tpu_custom_call.1} parent=11 // pred_region
          _
        $region20: #{tpu_custom_call.1} parent=11 // pred_fallthru
          _
        // Predicated region
        $region21: #{tpu_custom_call.1} parent=11 // pred_check
          %p183 = pneg %p107
        $region22: #{tpu_custom_call.1} parent=11 // pred_check_branch
          %185 = sbr.rel (%p183) target = $region24
        $region23: #{tpu_custom_call.1} parent=11 // pred_region
          _
        $region24: #{tpu_custom_call.1} parent=11 // pred_fallthru
          _
        // Predicated region
        $region25: #{tpu_custom_call.1} parent=11 // pred_check
          %p186 = pneg %p128
        $region26: #{tpu_custom_call.1} parent=11 // pred_check_branch
          %188 = sbr.rel (%p186) target = $region28
        $region27: #{tpu_custom_call.1} parent=11 // pred_region
          _
        $region28: #{tpu_custom_call.1} parent=11 // pred_fallthru
          _
      $region12: #{tpu_custom_call.1} parent=5 // pred_fallthru
        _
      %p189 = scmp.lt.s32.totalorder %s18, 2
      // Predicated region
      $region29: #{tpu_custom_call.1} parent=5 // pred_check
        %p190 = pneg %p189
      $region30: #{tpu_custom_call.1} parent=5 // pred_check_branch
        %192 = sbr.rel (%p190) target = $region32
      $region31: #{tpu_custom_call.1} parent=5 // pred_region
        // Predicated region
        $region33: #{tpu_custom_call.1} parent=31 // pred_check
          %p193 = pneg %p38
        $region34: #{tpu_custom_call.1} parent=31 // pred_check_branch
          %195 = sbr.rel (%p193) target = $region36
        $region35: #{tpu_custom_call.1} parent=31 // pred_region
          %s196 = sand.u32 %s28, 1
          %s197 = scalar_lea.sflag [#allocation3], %s196
          %s198 = sand.u32 %s28, 1
          %s199 = smul.addr %s198, 8
          %s200 = scalar_lea.vmem [#allocation2], %s199
          %s202 = ssub.s32 128, 128
          %203 = vsyncadd %s197, %s202
          %s204 = smul.addr %s18, 2
          %s205 = smul.addr %s204, 64
          %s206 = scalar_lea.hbm %s0, %s205
          %s208 = sshll.u32 %s200, 4
          %s209 = int_to_ptr.vmem [resolvable:$true] %s208
          %211 = dma.hbm_to_vmem [thread:$0]  %s206, 128, %s209, %s197
        $region36: #{tpu_custom_call.1} parent=31 // pred_fallthru
          _
      $region32: #{tpu_custom_call.1} parent=5 // pred_fallthru
        _
      %p212 = scmp.le.s32.totalorder 1, %s18
      %p213 = scmp.lt.s32.totalorder %s18, 3
      %p214 = pnand %p212, %p213
      %p215 = pneg %p214
      // Predicated region
      $region37: #{tpu_custom_call.1} parent=5 // pred_check
        _
      $region38: #{tpu_custom_call.1} parent=5 // pred_check_branch
        %217 = sbr.rel (%p214) target = $region40
      $region39: #{tpu_custom_call.1} parent=5 // pred_region
        %s218 = ssub.s32 %s18, 1
        %s219 = sand.u32 %s31, 1
        %s220 = scalar_lea.sflag [#allocation3], %s219
        %s221 = sand.u32 %s31, 1
        %s222 = smul.addr %s221, 8
        %s223 = scalar_lea.vmem [#allocation2], %s222
        // Predicated region
        $region41: #{tpu_custom_call.1} parent=39 // pred_check
          %p224 = pneg %p44
        $region42: #{tpu_custom_call.1} parent=39 // pred_check_branch
          %226 = sbr.rel (%p224) target = $region44
        $region43: #{tpu_custom_call.1} parent=39 // pred_region
          %227 = dma.done %s220, 128
        $region44: #{tpu_custom_call.1} parent=39 // pred_fallthru
          _
        // Predicated region
        $region45: #{tpu_custom_call.1} parent=39 // pred_check
          %p228 = pneg %p65
        $region46: #{tpu_custom_call.1} parent=39 // pred_check_branch
          %230 = sbr.rel (%p228) target = $region48
        $region47: #{tpu_custom_call.1} parent=39 // pred_region
          %231 = dma.done [#allocation6], 64
        $region48: #{tpu_custom_call.1} parent=39 // pred_fallthru
          _
        %s232 = sand.u32 %s31, 1
        %s233 = scalar_lea.sflag [#allocation3], %s232
        %s234 = sand.u32 %s31, 1
        %s235 = smul.addr %s234, 8
        %s236 = scalar_lea.vmem [#allocation2], %s235
        %p237 = pneg %p44
        %p238 = pneg %p41
        %p239 = pneg %p65
        %p240 = pneg %p62
        %p241 = pneg %p86
        %p242 = pneg %p83
        %p243 = pneg %p107
        %p244 = pneg %p104
        %p245 = pneg %p128
        %p246 = pneg %p125
        %p247 = pneg %p154
        %p248 = pneg %p151
        %s249 = sand.u32 %s141, 1
        %s250 = scalar_lea.sflag [#allocation4], %s249
        %s251 = sand.u32 %s141, 1
        %s252 = smul.addr %s251, 8
        %s253 = scalar_lea.vmem [#allocation7], %s252
        %v254 = vld [vmem:[%s223] sm:$0xff]
        %v256 = vcombine.high %v254, %v254
        %vm258 = vcmask 1043456
        %v259 = vsel %vm258, %v254, 0.0
        %v260 = vsel %vm258, %v256, 0.0
        %v261 = vadd.f32 %v259, %v260
        %262 = vadd.xlane.f32.xlu0 %v261
        %v263 = vpop.xlane.xlu0 %262
        %v264 = vmul.f32 %v263, 0.00390625
        %v265 = vld [vmem:[#allocation5] sm:$0xf]
        %v266 = vld [vmem:[%s2] sm:$0x1]
        %v268 = vlaneseq
        %v269 = vand.u32 %v268, 127
        %v270 = vlaneseq
        %v271 = vshrl.u32 %v270, 7
        %v272 = vsub.s32 %v269, %v271
        %v273 = vrot.slane %v264, %v272
        %vm274 = vcmask 31744
        %v275 = vsel %vm274, %v273, 0
        %v278 = vsel %vm258, %v265, 0
        %280 = vmatprep.subr.mxu0 0.0
        %v281 = vand.u32 %v278, 4294901760
        %282 = vmatpush1.msra.mxu0 %v281
        %283 = vmatprep.subr.mxu0 0.0
        %284 = vmatpush1.msra.mxu0 0.0
        %285 = vmatprep.subr.mxu0 0.0
        %286 = vmatpush1.msra.mxu0 0.0
        %287 = vmatprep.subr.mxu0 0.0
        %288 = vmatpush1.msra.mxu0 0.0
        %289 = vmatprep.subr.mxu0 0.0
        %290 = vmatpush1.msra.mxu0 0.0
        %291 = vmatprep.subr.mxu0 0.0
        %292 = vmatpush1.msra.mxu0 0.0
        %293 = vmatprep.subr.mxu0 0.0
        %294 = vmatpush1.msra.mxu0 0.0
        %295 = vmatprep.subr.mxu0 0.0
        %296 = vmatpush1.msra.mxu0 0.0
        %297 = vmatprep.subr.mxu0 0.0
        %298 = vmatpush1.msra.mxu0 0.0
        %299 = vmatprep.subr.mxu0 0.0
        %300 = vmatpush1.msra.mxu0 0.0
        %301 = vmatprep.subr.mxu0 0.0
        %302 = vmatpush1.msra.mxu0 0.0
        %303 = vmatprep.subr.mxu0 0.0
        %304 = vmatpush1.msra.mxu0 0.0
        %305 = vmatprep.subr.mxu0 0.0
        %306 = vmatpush1.msra.mxu0 0.0
        %307 = vmatprep.subr.mxu0 0.0
        %308 = vmatpush1.msra.mxu0 0.0
        %309 = vmatprep.subr.mxu0 0.0
        %310 = vmatpush1.msra.mxu0 0.0
        %311 = vmatprep.subr.mxu0 0.0
        %312 = vmatpush1.msra.mxu0 0.0
        %313 = vmatprep.subr.mxu0 0.0
        %314 = vmatpush1.msra.mxu0 0.0
        %315 = vmatprep.subr.mxu0 0.0
        %316 = vmatpush1.msra.mxu0 0.0
        %317 = vmatprep.subr.mxu0 0.0
        %318 = vmatpush1.msra.mxu0 0.0
        %319 = vmatprep.subr.mxu0 0.0
        %320 = vmatpush1.msra.mxu0 0.0
        %321 = vmatprep.subr.mxu0 0.0
        %322 = vmatpush1.msra.mxu0 0.0
        %323 = vmatprep.subr.mxu0 0.0
        %324 = vmatpush1.msra.mxu0 0.0
        %325 = vmatprep.subr.mxu0 0.0
        %326 = vmatpush1.msra.mxu0 0.0
        %327 = vmatprep.subr.mxu0 0.0
        %328 = vmatpush1.msra.mxu0 0.0
        %329 = vmatprep.subr.mxu0 0.0
        %330 = vmatpush1.msra.mxu0 0.0
        %331 = vmatprep.subr.mxu0 0.0
        %332 = vmatpush1.msra.mxu0 0.0
        %333 = vmatprep.subr.mxu0 0.0
        %334 = vmatpush1.msra.mxu0 0.0
        %335 = vmatprep.subr.mxu0 0.0
        %336 = vmatpush1.msra.mxu0 0.0
        %337 = vmatprep.subr.mxu0 0.0
        %338 = vmatpush1.msra.mxu0 0.0
        %339 = vmatprep.subr.mxu0 0.0
        %340 = vmatpush1.msra.mxu0 0.0
        %341 = vmatprep.subr.mxu0 0.0
        %342 = vmatpush1.msra.mxu0 0.0
        %343 = vmatprep.subr.mxu0 0.0
        %344 = vmatpush1.msra.mxu0 0.0
        %345 = vmatprep.mubr.f32.mxu0 0.0
        %v346 = vand.u32 %v275, 4294901760
        %v347 = vsub.f32 %v275, %v346
        %v348 = vand.u32 %v347, 4294901760
        %v349 = vsub.f32 %v347, %v348
        %v350 = vand.u32 %v349, 4294901760
        %351 = vmatmul.mubr.f32.gmra.mrb[0].mxu0 %v350
        %v352 = vpop.f32.mrb[0].mxu0
        %v353 = vadd.f32 %v266, %v352
        %v354 = vpop.f32.mrb[0].mxu0
        %355 = vdwg.mxu0
        %356 = vmatprep.subr.mxu0 0.0
        %v357 = vand.u32 %v278, 4294901760
        %v358 = vsub.f32 %v278, %v357
        %v359 = vand.u32 %v358, 4294901760
        %v360 = vsub.f32 %v358, %v359
        %v361 = vand.u32 %v360, 4294901760
        %362 = vmatpush1.msra.mxu0 %v361
        %363 = vmatprep.subr.mxu0 0.0
        %364 = vmatpush1.msra.mxu0 0.0
        %365 = vmatprep.subr.mxu0 0.0
        %366 = vmatpush1.msra.mxu0 0.0
        %367 = vmatprep.subr.mxu0 0.0
        %368 = vmatpush1.msra.mxu0 0.0
        %369 = vmatprep.subr.mxu0 0.0
        %370 = vmatpush1.msra.mxu0 0.0
        %371 = vmatprep.subr.mxu0 0.0
        %372 = vmatpush1.msra.mxu0 0.0
        %373 = vmatprep.subr.mxu0 0.0
        %374 = vmatpush1.msra.mxu0 0.0
        %375 = vmatprep.subr.mxu0 0.0
        %376 = vmatpush1.msra.mxu0 0.0
        %377 = vmatprep.subr.mxu0 0.0
        %378 = vmatpush1.msra.mxu0 0.0
        %379 = vmatprep.subr.mxu0 0.0
        %380 = vmatpush1.msra.mxu0 0.0
        %381 = vmatprep.subr.mxu0 0.0
        %382 = vmatpush1.msra.mxu0 0.0
        %383 = vmatprep.subr.mxu0 0.0
        %384 = vmatpush1.msra.mxu0 0.0
        %385 = vmatprep.subr.mxu0 0.0
        %386 = vmatpush1.msra.mxu0 0.0
        %387 = vmatprep.subr.mxu0 0.0
        %388 = vmatpush1.msra.mxu0 0.0
        %389 = vmatprep.subr.mxu0 0.0
        %390 = vmatpush1.msra.mxu0 0.0
        %391 = vmatprep.subr.mxu0 0.0
        %392 = vmatpush1.msra.mxu0 0.0
        %393 = vmatprep.subr.mxu0 0.0
        %394 = vmatpush1.msra.mxu0 0.0
        %395 = vmatprep.subr.mxu0 0.0
        %396 = vmatpush1.msra.mxu0 0.0
        %397 = vmatprep.subr.mxu0 0.0
        %398 = vmatpush1.msra.mxu0 0.0
        %399 = vmatprep.subr.mxu0 0.0
        %400 = vmatpush1.msra.mxu0 0.0
        %401 = vmatprep.subr.mxu0 0.0
        %402 = vmatpush1.msra.mxu0 0.0
        %403 = vmatprep.subr.mxu0 0.0
        %404 = vmatpush1.msra.mxu0 0.0
        %405 = vmatprep.subr.mxu0 0.0
        %406 = vmatpush1.msra.mxu0 0.0
        %407 = vmatprep.subr.mxu0 0.0
        %408 = vmatpush1.msra.mxu0 0.0
        %409 = vmatprep.subr.mxu0 0.0
        %410 = vmatpush1.msra.mxu0 0.0
        %411 = vmatprep.subr.mxu0 0.0
        %412 = vmatpush1.msra.mxu0 0.0
        %413 = vmatprep.subr.mxu0 0.0
        %414 = vmatpush1.msra.mxu0 0.0
        %415 = vmatprep.subr.mxu0 0.0
        %416 = vmatpush1.msra.mxu0 0.0
        %417 = vmatprep.subr.mxu0 0.0
        %418 = vmatpush1.msra.mxu0 0.0
        %419 = vmatprep.subr.mxu0 0.0
        %420 = vmatpush1.msra.mxu0 0.0
        %421 = vmatprep.subr.mxu0 0.0
        %422 = vmatpush1.msra.mxu0 0.0
        %423 = vmatprep.subr.mxu0 0.0
        %424 = vmatpush1.msra.mxu0 0.0
        %425 = vmatprep.mubr.f32.mxu0 0.0
        %v426 = vand.u32 %v275, 4294901760
        %427 = vmatmul.mubr.f32.gmra.mrb[0].mxu0 %v426
        %v428 = vpop.f32.mrb[0].mxu0
        %v429 = vadd.f32 %v353, %v428
        %v430 = vpop.f32.mrb[0].mxu0
        %431 = vdwg.mxu0
        %432 = vmatprep.subr.mxu0 0.0
        %v433 = vand.u32 %v278, 4294901760
        %v434 = vsub.f32 %v278, %v433
        %435 = vmatpush1.msra.mxu0 %v434
        %436 = vmatprep.subr.mxu0 0.0
        %437 = vmatpush1.msra.mxu0 0.0
        %438 = vmatprep.subr.mxu0 0.0
        %439 = vmatpush1.msra.mxu0 0.0
        %440 = vmatprep.subr.mxu0 0.0
        %441 = vmatpush1.msra.mxu0 0.0
        %442 = vmatprep.subr.mxu0 0.0
        %443 = vmatpush1.msra.mxu0 0.0
        %444 = vmatprep.subr.mxu0 0.0
        %445 = vmatpush1.msra.mxu0 0.0
        %446 = vmatprep.subr.mxu0 0.0
        %447 = vmatpush1.msra.mxu0 0.0
        %448 = vmatprep.subr.mxu0 0.0
        %449 = vmatpush1.msra.mxu0 0.0
        %450 = vmatprep.subr.mxu0 0.0
        %451 = vmatpush1.msra.mxu0 0.0
        %452 = vmatprep.subr.mxu0 0.0
        %453 = vmatpush1.msra.mxu0 0.0
        %454 = vmatprep.subr.mxu0 0.0
        %455 = vmatpush1.msra.mxu0 0.0
        %456 = vmatprep.subr.mxu0 0.0
        %457 = vmatpush1.msra.mxu0 0.0
        %458 = vmatprep.subr.mxu0 0.0
        %459 = vmatpush1.msra.mxu0 0.0
        %460 = vmatprep.subr.mxu0 0.0
        %461 = vmatpush1.msra.mxu0 0.0
        %462 = vmatprep.subr.mxu0 0.0
        %463 = vmatpush1.msra.mxu0 0.0
        %464 = vmatprep.subr.mxu0 0.0
        %465 = vmatpush1.msra.mxu0 0.0
        %466 = vmatprep.subr.mxu0 0.0
        %467 = vmatpush1.msra.mxu0 0.0
        %468 = vmatprep.subr.mxu0 0.0
        %469 = vmatpush1.msra.mxu0 0.0
        %470 = vmatprep.subr.mxu0 0.0
        %471 = vmatpush1.msra.mxu0 0.0
        %472 = vmatprep.subr.mxu0 0.0
        %473 = vmatpush1.msra.mxu0 0.0
        %474 = vmatprep.subr.mxu0 0.0
        %475 = vmatpush1.msra.mxu0 0.0
        %476 = vmatprep.subr.mxu0 0.0
        %477 = vmatpush1.msra.mxu0 0.0
        %478 = vmatprep.subr.mxu0 0.0
        %479 = vmatpush1.msra.mxu0 0.0
        %480 = vmatprep.subr.mxu0 0.0
        %481 = vmatpush1.msra.mxu0 0.0
        %482 = vmatprep.subr.mxu0 0.0
        %483 = vmatpush1.msra.mxu0 0.0
        %484 = vmatprep.subr.mxu0 0.0
        %485 = vmatpush1.msra.mxu0 0.0
        %486 = vmatprep.subr.mxu0 0.0
        %487 = vmatpush1.msra.mxu0 0.0
        %488 = vmatprep.subr.mxu0 0.0
        %489 = vmatpush1.msra.mxu0 0.0
        %490 = vmatprep.subr.mxu0 0.0
        %491 = vmatpush1.msra.mxu0 0.0
        %492 = vmatprep.subr.mxu0 0.0
        %493 = vmatpush1.msra.mxu0 0.0
        %494 = vmatprep.subr.mxu0 0.0
        %495 = vmatpush1.msra.mxu0 0.0
        %496 = vmatprep.subr.mxu0 0.0
        %497 = vmatpush1.msra.mxu0 0.0
        %498 = vmatprep.mubr.f32.mxu0 0.0
        %v499 = vand.u32 %v275, 4294901760
        %v500 = vsub.f32 %v275, %v499
        %501 = vmatmul.mubr.f32.gmra.mrb[0].mxu0 %v500
        %v502 = vpop.f32.mrb[0].mxu0
        %v503 = vadd.f32 %v429, %v502
        %v504 = vpop.f32.mrb[0].mxu0
        %505 = vdwg.mxu0
        %506 = vmatprep.subr.mxu0 0.0
        %v507 = vand.u32 %v278, 4294901760
        %508 = vmatpush1.msra.mxu0 %v507
        %509 = vmatprep.subr.mxu0 0.0
        %510 = vmatpush1.msra.mxu0 0.0
        %511 = vmatprep.subr.mxu0 0.0
        %512 = vmatpush1.msra.mxu0 0.0
        %513 = vmatprep.subr.mxu0 0.0
        %514 = vmatpush1.msra.mxu0 0.0
        %515 = vmatprep.subr.mxu0 0.0
        %516 = vmatpush1.msra.mxu0 0.0
        %517 = vmatprep.subr.mxu0 0.0
        %518 = vmatpush1.msra.mxu0 0.0
        %519 = vmatprep.subr.mxu0 0.0
        %520 = vmatpush1.msra.mxu0 0.0
        %521 = vmatprep.subr.mxu0 0.0
        %522 = vmatpush1.msra.mxu0 0.0
        %523 = vmatprep.subr.mxu0 0.0
        %524 = vmatpush1.msra.mxu0 0.0
        %525 = vmatprep.subr.mxu0 0.0
        %526 = vmatpush1.msra.mxu0 0.0
        %527 = vmatprep.subr.mxu0 0.0
        %528 = vmatpush1.msra.mxu0 0.0
        %529 = vmatprep.subr.mxu0 0.0
        %530 = vmatpush1.msra.mxu0 0.0
        %531 = vmatprep.subr.mxu0 0.0
        %532 = vmatpush1.msra.mxu0 0.0
        %533 = vmatprep.subr.mxu0 0.0
        %534 = vmatpush1.msra.mxu0 0.0
        %535 = vmatprep.subr.mxu0 0.0
        %536 = vmatpush1.msra.mxu0 0.0
        %537 = vmatprep.subr.mxu0 0.0
        %538 = vmatpush1.msra.mxu0 0.0
        %539 = vmatprep.subr.mxu0 0.0
        %540 = vmatpush1.msra.mxu0 0.0
        %541 = vmatprep.subr.mxu0 0.0
        %542 = vmatpush1.msra.mxu0 0.0
        %543 = vmatprep.subr.mxu0 0.0
        %544 = vmatpush1.msra.mxu0 0.0
        %545 = vmatprep.subr.mxu0 0.0
        %546 = vmatpush1.msra.mxu0 0.0
        %547 = vmatprep.subr.mxu0 0.0
        %548 = vmatpush1.msra.mxu0 0.0
        %549 = vmatprep.subr.mxu0 0.0
        %550 = vmatpush1.msra.mxu0 0.0
        %551 = vmatprep.subr.mxu0 0.0
        %552 = vmatpush1.msra.mxu0 0.0
        %553 = vmatprep.subr.mxu0 0.0
        %554 = vmatpush1.msra.mxu0 0.0
        %555 = vmatprep.subr.mxu0 0.0
        %556 = vmatpush1.msra.mxu0 0.0
        %557 = vmatprep.subr.mxu0 0.0
        %558 = vmatpush1.msra.mxu0 0.0
        %559 = vmatprep.subr.mxu0 0.0
        %560 = vmatpush1.msra.mxu0 0.0
        %561 = vmatprep.subr.mxu0 0.0
        %562 = vmatpush1.msra.mxu0 0.0
        %563 = vmatprep.subr.mxu0 0.0
        %564 = vmatpush1.msra.mxu0 0.0
        %565 = vmatprep.subr.mxu0 0.0
        %566 = vmatpush1.msra.mxu0 0.0
        %567 = vmatprep.subr.mxu0 0.0
        %568 = vmatpush1.msra.mxu0 0.0
        %569 = vmatprep.subr.mxu0 0.0
        %570 = vmatpush1.msra.mxu0 0.0
        %571 = vmatprep.mubr.f32.mxu0 0.0
        %v572 = vand.u32 %v275, 4294901760
        %v573 = vsub.f32 %v275, %v572
        %v574 = vand.u32 %v573, 4294901760
        %575 = vmatmul.mubr.f32.gmra.mrb[0].mxu0 %v574
        %v576 = vpop.f32.mrb[0].mxu0
        %v577 = vadd.f32 %v503, %v576
        %v578 = vpop.f32.mrb[0].mxu0
        %579 = vdwg.mxu0
        %580 = vmatprep.subr.mxu0 0.0
        %v581 = vand.u32 %v278, 4294901760
        %v582 = vsub.f32 %v278, %v581
        %v583 = vand.u32 %v582, 4294901760
        %584 = vmatpush1.msra.mxu0 %v583
        %585 = vmatprep.subr.mxu0 0.0
        %586 = vmatpush1.msra.mxu0 0.0
        %587 = vmatprep.subr.mxu0 0.0
        %588 = vmatpush1.msra.mxu0 0.0
        %589 = vmatprep.subr.mxu0 0.0
        %590 = vmatpush1.msra.mxu0 0.0
        %591 = vmatprep.subr.mxu0 0.0
        %592 = vmatpush1.msra.mxu0 0.0
        %593 = vmatprep.subr.mxu0 0.0
        %594 = vmatpush1.msra.mxu0 0.0
        %595 = vmatprep.subr.mxu0 0.0
        %596 = vmatpush1.msra.mxu0 0.0
        %597 = vmatprep.subr.mxu0 0.0
        %598 = vmatpush1.msra.mxu0 0.0
        %599 = vmatprep.subr.mxu0 0.0
        %600 = vmatpush1.msra.mxu0 0.0
        %601 = vmatprep.subr.mxu0 0.0
        %602 = vmatpush1.msra.mxu0 0.0
        %603 = vmatprep.subr.mxu0 0.0
        %604 = vmatpush1.msra.mxu0 0.0
        %605 = vmatprep.subr.mxu0 0.0
        %606 = vmatpush1.msra.mxu0 0.0
        %607 = vmatprep.subr.mxu0 0.0
        %608 = vmatpush1.msra.mxu0 0.0
        %609 = vmatprep.subr.mxu0 0.0
        %610 = vmatpush1.msra.mxu0 0.0
        %611 = vmatprep.subr.mxu0 0.0
        %612 = vmatpush1.msra.mxu0 0.0
        %613 = vmatprep.subr.mxu0 0.0
        %614 = vmatpush1.msra.mxu0 0.0
        %615 = vmatprep.subr.mxu0 0.0
        %616 = vmatpush1.msra.mxu0 0.0
        %617 = vmatprep.subr.mxu0 0.0
        %618 = vmatpush1.msra.mxu0 0.0
        %619 = vmatprep.subr.mxu0 0.0
        %620 = vmatpush1.msra.mxu0 0.0
        %621 = vmatprep.subr.mxu0 0.0
        %622 = vmatpush1.msra.mxu0 0.0
        %623 = vmatprep.subr.mxu0 0.0
        %624 = vmatpush1.msra.mxu0 0.0
        %625 = vmatprep.subr.mxu0 0.0
        %626 = vmatpush1.msra.mxu0 0.0
        %627 = vmatprep.subr.mxu0 0.0
        %628 = vmatpush1.msra.mxu0 0.0
        %629 = vmatprep.subr.mxu0 0.0
        %630 = vmatpush1.msra.mxu0 0.0
        %631 = vmatprep.subr.mxu0 0.0
        %632 = vmatpush1.msra.mxu0 0.0
        %633 = vmatprep.subr.mxu0 0.0
        %634 = vmatpush1.msra.mxu0 0.0
        %635 = vmatprep.subr.mxu0 0.0
        %636 = vmatpush1.msra.mxu0 0.0
        %637 = vmatprep.subr.mxu0 0.0
        %638 = vmatpush1.msra.mxu0 0.0
        %639 = vmatprep.subr.mxu0 0.0
        %640 = vmatpush1.msra.mxu0 0.0
        %641 = vmatprep.subr.mxu0 0.0
        %642 = vmatpush1.msra.mxu0 0.0
        %643 = vmatprep.subr.mxu0 0.0
        %644 = vmatpush1.msra.mxu0 0.0
        %645 = vmatprep.subr.mxu0 0.0
        %646 = vmatpush1.msra.mxu0 0.0
        %647 = vmatprep.mubr.f32.mxu0 0.0
        %v648 = vand.u32 %v275, 4294901760
        %649 = vmatmul.mubr.f32.gmra.mrb[0].mxu0 %v648
        %v650 = vpop.f32.mrb[0].mxu0
        %v651 = vadd.f32 %v577, %v650
        %v652 = vpop.f32.mrb[0].mxu0
        %653 = vdwg.mxu0
        %654 = vmatprep.subr.mxu0 0.0
        %v655 = vand.u32 %v278, 4294901760
        %656 = vmatpush1.msra.mxu0 %v655
        %657 = vmatprep.subr.mxu0 0.0
        %658 = vmatpush1.msra.mxu0 0.0
        %659 = vmatprep.subr.mxu0 0.0
        %660 = vmatpush1.msra.mxu0 0.0
        %661 = vmatprep.subr.mxu0 0.0
        %662 = vmatpush1.msra.mxu0 0.0
        %663 = vmatprep.subr.mxu0 0.0
        %664 = vmatpush1.msra.mxu0 0.0
        %665 = vmatprep.subr.mxu0 0.0
        %666 = vmatpush1.msra.mxu0 0.0
        %667 = vmatprep.subr.mxu0 0.0
        %668 = vmatpush1.msra.mxu0 0.0
        %669 = vmatprep.subr.mxu0 0.0
        %670 = vmatpush1.msra.mxu0 0.0
        %671 = vmatprep.subr.mxu0 0.0
        %672 = vmatpush1.msra.mxu0 0.0
        %673 = vmatprep.subr.mxu0 0.0
        %674 = vmatpush1.msra.mxu0 0.0
        %675 = vmatprep.subr.mxu0 0.0
        %676 = vmatpush1.msra.mxu0 0.0
        %677 = vmatprep.subr.mxu0 0.0
        %678 = vmatpush1.msra.mxu0 0.0
        %679 = vmatprep.subr.mxu0 0.0
        %680 = vmatpush1.msra.mxu0 0.0
        %681 = vmatprep.subr.mxu0 0.0
        %682 = vmatpush1.msra.mxu0 0.0
        %683 = vmatprep.subr.mxu0 0.0
        %684 = vmatpush1.msra.mxu0 0.0
        %685 = vmatprep.subr.mxu0 0.0
        %686 = vmatpush1.msra.mxu0 0.0
        %687 = vmatprep.subr.mxu0 0.0
        %688 = vmatpush1.msra.mxu0 0.0
        %689 = vmatprep.subr.mxu0 0.0
        %690 = vmatpush1.msra.mxu0 0.0
        %691 = vmatprep.subr.mxu0 0.0
        %692 = vmatpush1.msra.mxu0 0.0
        %693 = vmatprep.subr.mxu0 0.0
        %694 = vmatpush1.msra.mxu0 0.0
        %695 = vmatprep.subr.mxu0 0.0
        %696 = vmatpush1.msra.mxu0 0.0
        %697 = vmatprep.subr.mxu0 0.0
        %698 = vmatpush1.msra.mxu0 0.0
        %699 = vmatprep.subr.mxu0 0.0
        %700 = vmatpush1.msra.mxu0 0.0
        %701 = vmatprep.subr.mxu0 0.0
        %702 = vmatpush1.msra.mxu0 0.0
        %703 = vmatprep.subr.mxu0 0.0
        %704 = vmatpush1.msra.mxu0 0.0
        %705 = vmatprep.subr.mxu0 0.0
        %706 = vmatpush1.msra.mxu0 0.0
        %707 = vmatprep.subr.mxu0 0.0
        %708 = vmatpush1.msra.mxu0 0.0
        %709 = vmatprep.subr.mxu0 0.0
        %710 = vmatpush1.msra.mxu0 0.0
        %711 = vmatprep.subr.mxu0 0.0
        %712 = vmatpush1.msra.mxu0 0.0
        %713 = vmatprep.subr.mxu0 0.0
        %714 = vmatpush1.msra.mxu0 0.0
        %715 = vmatprep.subr.mxu0 0.0
        %716 = vmatpush1.msra.mxu0 0.0
        %717 = vmatprep.subr.mxu0 0.0
        %718 = vmatpush1.msra.mxu0 0.0
        %719 = vmatprep.mubr.f32.mxu0 0.0
        %v720 = vand.u32 %v275, 4294901760
        %721 = vmatmul.mubr.f32.gmra.mrb[0].mxu0 %v720
        %v722 = vpop.f32.mrb[0].mxu0
        %v723 = vadd.f32 %v651, %v722
        %v724 = vpop.f32.mrb[0].mxu0
        %725 = vdwg.mxu0
        %v726 = vmax.f32 %v723, 0.0
        %v727 = vld [vmem:[%s3] sm:$0xf]
        %v728 = vld [vmem:[%s4] sm:$0x1]
        %v730 = vsel %vm274, %v726, 0
        %v733 = vsel %vm258, %v727, 0
        %735 = vmatprep.subr.mxu0 0.0
        %v736 = vand.u32 %v733, 4294901760
        %737 = vmatpush1.msra.mxu0 %v736
        %738 = vmatprep.subr.mxu0 0.0
        %739 = vmatpush1.msra.mxu0 0.0
        %740 = vmatprep.subr.mxu0 0.0
        %741 = vmatpush1.msra.mxu0 0.0
        %742 = vmatprep.subr.mxu0 0.0
        %743 = vmatpush1.msra.mxu0 0.0
        %744 = vmatprep.subr.mxu0 0.0
        %745 = vmatpush1.msra.mxu0 0.0
        %746 = vmatprep.subr.mxu0 0.0
        %747 = vmatpush1.msra.mxu0 0.0
        %748 = vmatprep.subr.mxu0 0.0
        %749 = vmatpush1.msra.mxu0 0.0
        %750 = vmatprep.subr.mxu0 0.0
        %751 = vmatpush1.msra.mxu0 0.0
        %752 = vmatprep.subr.mxu0 0.0
        %753 = vmatpush1.msra.mxu0 0.0
        %754 = vmatprep.subr.mxu0 0.0
        %755 = vmatpush1.msra.mxu0 0.0
        %756 = vmatprep.subr.mxu0 0.0
        %757 = vmatpush1.msra.mxu0 0.0
        %758 = vmatprep.subr.mxu0 0.0
        %759 = vmatpush1.msra.mxu0 0.0
        %760 = vmatprep.subr.mxu0 0.0
        %761 = vmatpush1.msra.mxu0 0.0
        %762 = vmatprep.subr.mxu0 0.0
        %763 = vmatpush1.msra.mxu0 0.0
        %764 = vmatprep.subr.mxu0 0.0
        %765 = vmatpush1.msra.mxu0 0.0
        %766 = vmatprep.subr.mxu0 0.0
        %767 = vmatpush1.msra.mxu0 0.0
        %768 = vmatprep.subr.mxu0 0.0
        %769 = vmatpush1.msra.mxu0 0.0
        %770 = vmatprep.subr.mxu0 0.0
        %771 = vmatpush1.msra.mxu0 0.0
        %772 = vmatprep.subr.mxu0 0.0
        %773 = vmatpush1.msra.mxu0 0.0
        %774 = vmatprep.subr.mxu0 0.0
        %775 = vmatpush1.msra.mxu0 0.0
        %776 = vmatprep.subr.mxu0 0.0
        %777 = vmatpush1.msra.mxu0 0.0
        %778 = vmatprep.subr.mxu0 0.0
        %779 = vmatpush1.msra.mxu0 0.0
        %780 = vmatprep.subr.mxu0 0.0
        %781 = vmatpush1.msra.mxu0 0.0
        %782 = vmatprep.subr.mxu0 0.0
        %783 = vmatpush1.msra.mxu0 0.0
        %784 = vmatprep.subr.mxu0 0.0
        %785 = vmatpush1.msra.mxu0 0.0
        %786 = vmatprep.subr.mxu0 0.0
        %787 = vmatpush1.msra.mxu0 0.0
        %788 = vmatprep.subr.mxu0 0.0
        %789 = vmatpush1.msra.mxu0 0.0
        %790 = vmatprep.subr.mxu0 0.0
        %791 = vmatpush1.msra.mxu0 0.0
        %792 = vmatprep.subr.mxu0 0.0
        %793 = vmatpush1.msra.mxu0 0.0
        %794 = vmatprep.subr.mxu0 0.0
        %795 = vmatpush1.msra.mxu0 0.0
        %796 = vmatprep.subr.mxu0 0.0
        %797 = vmatpush1.msra.mxu0 0.0
        %798 = vmatprep.subr.mxu0 0.0
        %799 = vmatpush1.msra.mxu0 0.0
        %800 = vmatprep.mubr.f32.mxu0 0.0
        %v801 = vand.u32 %v730, 4294901760
        %v802 = vsub.f32 %v730, %v801
        %v803 = vand.u32 %v802, 4294901760
        %v804 = vsub.f32 %v802, %v803
        %v805 = vand.u32 %v804, 4294901760
        %806 = vmatmul.mubr.f32.gmra.mrb[0].mxu0 %v805
        %v807 = vpop.f32.mrb[0].mxu0
        %v808 = vadd.f32 %v728, %v807
        %v809 = vpop.f32.mrb[0].mxu0
        %810 = vdwg.mxu0
        %811 = vmatprep.subr.mxu0 0.0
        %v812 = vand.u32 %v733, 4294901760
        %v813 = vsub.f32 %v733, %v812
        %v814 = vand.u32 %v813, 4294901760
        %v815 = vsub.f32 %v813, %v814
        %v816 = vand.u32 %v815, 4294901760
        %817 = vmatpush1.msra.mxu0 %v816
        %818 = vmatprep.subr.mxu0 0.0
        %819 = vmatpush1.msra.mxu0 0.0
        %820 = vmatprep.subr.mxu0 0.0
        %821 = vmatpush1.msra.mxu0 0.0
        %822 = vmatprep.subr.mxu0 0.0
        %823 = vmatpush1.msra.mxu0 0.0
        %824 = vmatprep.subr.mxu0 0.0
        %825 = vmatpush1.msra.mxu0 0.0
        %826 = vmatprep.subr.mxu0 0.0
        %827 = vmatpush1.msra.mxu0 0.0
        %828 = vmatprep.subr.mxu0 0.0
        %829 = vmatpush1.msra.mxu0 0.0
        %830 = vmatprep.subr.mxu0 0.0
        %831 = vmatpush1.msra.mxu0 0.0
        %832 = vmatprep.subr.mxu0 0.0
        %833 = vmatpush1.msra.mxu0 0.0
        %834 = vmatprep.subr.mxu0 0.0
        %835 = vmatpush1.msra.mxu0 0.0
        %836 = vmatprep.subr.mxu0 0.0
        %837 = vmatpush1.msra.mxu0 0.0
        %838 = vmatprep.subr.mxu0 0.0
        %839 = vmatpush1.msra.mxu0 0.0
        %840 = vmatprep.subr.mxu0 0.0
        %841 = vmatpush1.msra.mxu0 0.0
        %842 = vmatprep.subr.mxu0 0.0
        %843 = vmatpush1.msra.mxu0 0.0
        %844 = vmatprep.subr.mxu0 0.0
        %845 = vmatpush1.msra.mxu0 0.0
        %846 = vmatprep.subr.mxu0 0.0
        %847 = vmatpush1.msra.mxu0 0.0
        %848 = vmatprep.subr.mxu0 0.0
        %849 = vmatpush1.msra.mxu0 0.0
        %850 = vmatprep.subr.mxu0 0.0
        %851 = vmatpush1.msra.mxu0 0.0
        %852 = vmatprep.subr.mxu0 0.0
        %853 = vmatpush1.msra.mxu0 0.0
        %854 = vmatprep.subr.mxu0 0.0
        %855 = vmatpush1.msra.mxu0 0.0
        %856 = vmatprep.subr.mxu0 0.0
        %857 = vmatpush1.msra.mxu0 0.0
        %858 = vmatprep.subr.mxu0 0.0
        %859 = vmatpush1.msra.mxu0 0.0
        %860 = vmatprep.subr.mxu0 0.0
        %861 = vmatpush1.msra.mxu0 0.0
        %862 = vmatprep.subr.mxu0 0.0
        %863 = vmatpush1.msra.mxu0 0.0
        %864 = vmatprep.subr.mxu0 0.0
        %865 = vmatpush1.msra.mxu0 0.0
        %866 = vmatprep.subr.mxu0 0.0
        %867 = vmatpush1.msra.mxu0 0.0
        %868 = vmatprep.subr.mxu0 0.0
        %869 = vmatpush1.msra.mxu0 0.0
        %870 = vmatprep.subr.mxu0 0.0
        %871 = vmatpush1.msra.mxu0 0.0
        %872 = vmatprep.subr.mxu0 0.0
        %873 = vmatpush1.msra.mxu0 0.0
        %874 = vmatprep.subr.mxu0 0.0
        %875 = vmatpush1.msra.mxu0 0.0
        %876 = vmatprep.subr.mxu0 0.0
        %877 = vmatpush1.msra.mxu0 0.0
        %878 = vmatprep.subr.mxu0 0.0
        %879 = vmatpush1.msra.mxu0 0.0
        %880 = vmatprep.mubr.f32.mxu0 0.0
        %v881 = vand.u32 %v730, 4294901760
        %882 = vmatmul.mubr.f32.gmra.mrb[0].mxu0 %v881
        %v883 = vpop.f32.mrb[0].mxu0
        %v884 = vadd.f32 %v808, %v883
        %v885 = vpop.f32.mrb[0].mxu0
        %886 = vdwg.mxu0
        %887 = vmatprep.subr.mxu0 0.0
        %v888 = vand.u32 %v733, 4294901760
        %v889 = vsub.f32 %v733, %v888
        %890 = vmatpush1.msra.mxu0 %v889
        %891 = vmatprep.subr.mxu0 0.0
        %892 = vmatpush1.msra.mxu0 0.0
        %893 = vmatprep.subr.mxu0 0.0
        %894 = vmatpush1.msra.mxu0 0.0
        %895 = vmatprep.subr.mxu0 0.0
        %896 = vmatpush1.msra.mxu0 0.0
        %897 = vmatprep.subr.mxu0 0.0
        %898 = vmatpush1.msra.mxu0 0.0
        %899 = vmatprep.subr.mxu0 0.0
        %900 = vmatpush1.msra.mxu0 0.0
        %901 = vmatprep.subr.mxu0 0.0
        %902 = vmatpush1.msra.mxu0 0.0
        %903 = vmatprep.subr.mxu0 0.0
        %904 = vmatpush1.msra.mxu0 0.0
        %905 = vmatprep.subr.mxu0 0.0
        %906 = vmatpush1.msra.mxu0 0.0
        %907 = vmatprep.subr.mxu0 0.0
        %908 = vmatpush1.msra.mxu0 0.0
        %909 = vmatprep.subr.mxu0 0.0
        %910 = vmatpush1.msra.mxu0 0.0
        %911 = vmatprep.subr.mxu0 0.0
        %912 = vmatpush1.msra.mxu0 0.0
        %913 = vmatprep.subr.mxu0 0.0
        %914 = vmatpush1.msra.mxu0 0.0
        %915 = vmatprep.subr.mxu0 0.0
        %916 = vmatpush1.msra.mxu0 0.0
        %917 = vmatprep.subr.mxu0 0.0
        %918 = vmatpush1.msra.mxu0 0.0
        %919 = vmatprep.subr.mxu0 0.0
        %920 = vmatpush1.msra.mxu0 0.0
        %921 = vmatprep.subr.mxu0 0.0
        %922 = vmatpush1.msra.mxu0 0.0
        %923 = vmatprep.subr.mxu0 0.0
        %924 = vmatpush1.msra.mxu0 0.0
        %925 = vmatprep.subr.mxu0 0.0
        %926 = vmatpush1.msra.mxu0 0.0
        %927 = vmatprep.subr.mxu0 0.0
        %928 = vmatpush1.msra.mxu0 0.0
        %929 = vmatprep.subr.mxu0 0.0
        %930 = vmatpush1.msra.mxu0 0.0
        %931 = vmatprep.subr.mxu0 0.0
        %932 = vmatpush1.msra.mxu0 0.0
        %933 = vmatprep.subr.mxu0 0.0
        %934 = vmatpush1.msra.mxu0 0.0
        %935 = vmatprep.subr.mxu0 0.0
        %936 = vmatpush1.msra.mxu0 0.0
        %937 = vmatprep.subr.mxu0 0.0
        %938 = vmatpush1.msra.mxu0 0.0
        %939 = vmatprep.subr.mxu0 0.0
        %940 = vmatpush1.msra.mxu0 0.0
        %941 = vmatprep.subr.mxu0 0.0
        %942 = vmatpush1.msra.mxu0 0.0
        %943 = vmatprep.subr.mxu0 0.0
        %944 = vmatpush1.msra.mxu0 0.0
        %945 = vmatprep.subr.mxu0 0.0
        %946 = vmatpush1.msra.mxu0 0.0
        %947 = vmatprep.subr.mxu0 0.0
        %948 = vmatpush1.msra.mxu0 0.0
        %949 = vmatprep.subr.mxu0 0.0
        %950 = vmatpush1.msra.mxu0 0.0
        %951 = vmatprep.subr.mxu0 0.0
        %952 = vmatpush1.msra.mxu0 0.0
        %953 = vmatprep.mubr.f32.mxu0 0.0
        %v954 = vand.u32 %v730, 4294901760
        %v955 = vsub.f32 %v730, %v954
        %956 = vmatmul.mubr.f32.gmra.mrb[0].mxu0 %v955
        %v957 = vpop.f32.mrb[0].mxu0
        %v958 = vadd.f32 %v884, %v957
        %v959 = vpop.f32.mrb[0].mxu0
        %960 = vdwg.mxu0
        %961 = vmatprep.subr.mxu0 0.0
        %v962 = vand.u32 %v733, 4294901760
        %963 = vmatpush1.msra.mxu0 %v962
        %964 = vmatprep.subr.mxu0 0.0
        %965 = vmatpush1.msra.mxu0 0.0
        %966 = vmatprep.subr.mxu0 0.0
        %967 = vmatpush1.msra.mxu0 0.0
        %968 = vmatprep.subr.mxu0 0.0
        %969 = vmatpush1.msra.mxu0 0.0
        %970 = vmatprep.subr.mxu0 0.0
        %971 = vmatpush1.msra.mxu0 0.0
        %972 = vmatprep.subr.mxu0 0.0
        %973 = vmatpush1.msra.mxu0 0.0
        %974 = vmatprep.subr.mxu0 0.0
        %975 = vmatpush1.msra.mxu0 0.0
        %976 = vmatprep.subr.mxu0 0.0
        %977 = vmatpush1.msra.mxu0 0.0
        %978 = vmatprep.subr.mxu0 0.0
        %979 = vmatpush1.msra.mxu0 0.0
        %980 = vmatprep.subr.mxu0 0.0
        %981 = vmatpush1.msra.mxu0 0.0
        %982 = vmatprep.subr.mxu0 0.0
        %983 = vmatpush1.msra.mxu0 0.0
        %984 = vmatprep.subr.mxu0 0.0
        %985 = vmatpush1.msra.mxu0 0.0
        %986 = vmatprep.subr.mxu0 0.0
        %987 = vmatpush1.msra.mxu0 0.0
        %988 = vmatprep.subr.mxu0 0.0
        %989 = vmatpush1.msra.mxu0 0.0
        %990 = vmatprep.subr.mxu0 0.0
        %991 = vmatpush1.msra.mxu0 0.0
        %992 = vmatprep.subr.mxu0 0.0
        %993 = vmatpush1.msra.mxu0 0.0
        %994 = vmatprep.subr.mxu0 0.0
        %995 = vmatpush1.msra.mxu0 0.0
        %996 = vmatprep.subr.mxu0 0.0
        %997 = vmatpush1.msra.mxu0 0.0
        %998 = vmatprep.subr.mxu0 0.0
        %999 = vmatpush1.msra.mxu0 0.0
        %1000 = vmatprep.subr.mxu0 0.0
        %1001 = vmatpush1.msra.mxu0 0.0
        %1002 = vmatprep.subr.mxu0 0.0
        %1003 = vmatpush1.msra.mxu0 0.0
        %1004 = vmatprep.subr.mxu0 0.0
        %1005 = vmatpush1.msra.mxu0 0.0
        %1006 = vmatprep.subr.mxu0 0.0
        %1007 = vmatpush1.msra.mxu0 0.0
        %1008 = vmatprep.subr.mxu0 0.0
        %1009 = vmatpush1.msra.mxu0 0.0
        %1010 = vmatprep.subr.mxu0 0.0
        %1011 = vmatpush1.msra.mxu0 0.0
        %1012 = vmatprep.subr.mxu0 0.0
        %1013 = vmatpush1.msra.mxu0 0.0
        %1014 = vmatprep.subr.mxu0 0.0
        %1015 = vmatpush1.msra.mxu0 0.0
        %1016 = vmatprep.subr.mxu0 0.0
        %1017 = vmatpush1.msra.mxu0 0.0
        %1018 = vmatprep.subr.mxu0 0.0
        %1019 = vmatpush1.msra.mxu0 0.0
        %1020 = vmatprep.subr.mxu0 0.0
        %1021 = vmatpush1.msra.mxu0 0.0
        %1022 = vmatprep.subr.mxu0 0.0
        %1023 = vmatpush1.msra.mxu0 0.0
        %1024 = vmatprep.subr.mxu0 0.0
        %1025 = vmatpush1.msra.mxu0 0.0
        %1026 = vmatprep.mubr.f32.mxu0 0.0
        %v1027 = vand.u32 %v730, 4294901760
        %v1028 = vsub.f32 %v730, %v1027
        %v1029 = vand.u32 %v1028, 4294901760
        %1030 = vmatmul.mubr.f32.gmra.mrb[0].mxu0 %v1029
        %v1031 = vpop.f32.mrb[0].mxu0
        %v1032 = vadd.f32 %v958, %v1031
        %v1033 = vpop.f32.mrb[0].mxu0
        %1034 = vdwg.mxu0
        %1035 = vmatprep.subr.mxu0 0.0
        %v1036 = vand.u32 %v733, 4294901760
        %v1037 = vsub.f32 %v733, %v1036
        %v1038 = vand.u32 %v1037, 4294901760
        %1039 = vmatpush1.msra.mxu0 %v1038
        %1040 = vmatprep.subr.mxu0 0.0
        %1041 = vmatpush1.msra.mxu0 0.0
        %1042 = vmatprep.subr.mxu0 0.0
        %1043 = vmatpush1.msra.mxu0 0.0
        %1044 = vmatprep.subr.mxu0 0.0
        %1045 = vmatpush1.msra.mxu0 0.0
        %1046 = vmatprep.subr.mxu0 0.0
        %1047 = vmatpush1.msra.mxu0 0.0
        %1048 = vmatprep.subr.mxu0 0.0
        %1049 = vmatpush1.msra.mxu0 0.0
        %1050 = vmatprep.subr.mxu0 0.0
        %1051 = vmatpush1.msra.mxu0 0.0
        %1052 = vmatprep.subr.mxu0 0.0
        %1053 = vmatpush1.msra.mxu0 0.0
        %1054 = vmatprep.subr.mxu0 0.0
        %1055 = vmatpush1.msra.mxu0 0.0
        %1056 = vmatprep.subr.mxu0 0.0
        %1057 = vmatpush1.msra.mxu0 0.0
        %1058 = vmatprep.subr.mxu0 0.0
        %1059 = vmatpush1.msra.mxu0 0.0
        %1060 = vmatprep.subr.mxu0 0.0
        %1061 = vmatpush1.msra.mxu0 0.0
        %1062 = vmatprep.subr.mxu0 0.0
        %1063 = vmatpush1.msra.mxu0 0.0
        %1064 = vmatprep.subr.mxu0 0.0
        %1065 = vmatpush1.msra.mxu0 0.0
        %1066 = vmatprep.subr.mxu0 0.0
        %1067 = vmatpush1.msra.mxu0 0.0
        %1068 = vmatprep.subr.mxu0 0.0
        %1069 = vmatpush1.msra.mxu0 0.0
        %1070 = vmatprep.subr.mxu0 0.0
        %1071 = vmatpush1.msra.mxu0 0.0
        %1072 = vmatprep.subr.mxu0 0.0
        %1073 = vmatpush1.msra.mxu0 0.0
        %1074 = vmatprep.subr.mxu0 0.0
        %1075 = vmatpush1.msra.mxu0 0.0
        %1076 = vmatprep.subr.mxu0 0.0
        %1077 = vmatpush1.msra.mxu0 0.0
        %1078 = vmatprep.subr.mxu0 0.0
        %1079 = vmatpush1.msra.mxu0 0.0
        %1080 = vmatprep.subr.mxu0 0.0
        %1081 = vmatpush1.msra.mxu0 0.0
        %1082 = vmatprep.subr.mxu0 0.0
        %1083 = vmatpush1.msra.mxu0 0.0
        %1084 = vmatprep.subr.mxu0 0.0
        %1085 = vmatpush1.msra.mxu0 0.0
        %1086 = vmatprep.subr.mxu0 0.0
        %1087 = vmatpush1.msra.mxu0 0.0
        %1088 = vmatprep.subr.mxu0 0.0
        %1089 = vmatpush1.msra.mxu0 0.0
        %1090 = vmatprep.subr.mxu0 0.0
        %1091 = vmatpush1.msra.mxu0 0.0
        %1092 = vmatprep.subr.mxu0 0.0
        %1093 = vmatpush1.msra.mxu0 0.0
        %1094 = vmatprep.subr.mxu0 0.0
        %1095 = vmatpush1.msra.mxu0 0.0
        %1096 = vmatprep.subr.mxu0 0.0
        %1097 = vmatpush1.msra.mxu0 0.0
        %1098 = vmatprep.subr.mxu0 0.0
        %1099 = vmatpush1.msra.mxu0 0.0
        %1100 = vmatprep.subr.mxu0 0.0
        %1101 = vmatpush1.msra.mxu0 0.0
        %1102 = vmatprep.mubr.f32.mxu0 0.0
        %v1103 = vand.u32 %v730, 4294901760
        %1104 = vmatmul.mubr.f32.gmra.mrb[0].mxu0 %v1103
        %v1105 = vpop.f32.mrb[0].mxu0
        %v1106 = vadd.f32 %v1032, %v1105
        %v1107 = vpop.f32.mrb[0].mxu0
        %1108 = vdwg.mxu0
        %1109 = vmatprep.subr.mxu0 0.0
        %v1110 = vand.u32 %v733, 4294901760
        %1111 = vmatpush1.msra.mxu0 %v1110
        %1112 = vmatprep.subr.mxu0 0.0
        %1113 = vmatpush1.msra.mxu0 0.0
        %1114 = vmatprep.subr.mxu0 0.0
        %1115 = vmatpush1.msra.mxu0 0.0
        %1116 = vmatprep.subr.mxu0 0.0
        %1117 = vmatpush1.msra.mxu0 0.0
        %1118 = vmatprep.subr.mxu0 0.0
        %1119 = vmatpush1.msra.mxu0 0.0
        %1120 = vmatprep.subr.mxu0 0.0
        %1121 = vmatpush1.msra.mxu0 0.0
        %1122 = vmatprep.subr.mxu0 0.0
        %1123 = vmatpush1.msra.mxu0 0.0
        %1124 = vmatprep.subr.mxu0 0.0
        %1125 = vmatpush1.msra.mxu0 0.0
        %1126 = vmatprep.subr.mxu0 0.0
        %1127 = vmatpush1.msra.mxu0 0.0
        %1128 = vmatprep.subr.mxu0 0.0
        %1129 = vmatpush1.msra.mxu0 0.0
        %1130 = vmatprep.subr.mxu0 0.0
        %1131 = vmatpush1.msra.mxu0 0.0
        %1132 = vmatprep.subr.mxu0 0.0
        %1133 = vmatpush1.msra.mxu0 0.0
        %1134 = vmatprep.subr.mxu0 0.0
        %1135 = vmatpush1.msra.mxu0 0.0
        %1136 = vmatprep.subr.mxu0 0.0
        %1137 = vmatpush1.msra.mxu0 0.0
        %1138 = vmatprep.subr.mxu0 0.0
        %1139 = vmatpush1.msra.mxu0 0.0
        %1140 = vmatprep.subr.mxu0 0.0
        %1141 = vmatpush1.msra.mxu0 0.0
        %1142 = vmatprep.subr.mxu0 0.0
        %1143 = vmatpush1.msra.mxu0 0.0
        %1144 = vmatprep.subr.mxu0 0.0
        %1145 = vmatpush1.msra.mxu0 0.0
        %1146 = vmatprep.subr.mxu0 0.0
        %1147 = vmatpush1.msra.mxu0 0.0
        %1148 = vmatprep.subr.mxu0 0.0
        %1149 = vmatpush1.msra.mxu0 0.0
        %1150 = vmatprep.subr.mxu0 0.0
        %1151 = vmatpush1.msra.mxu0 0.0
        %1152 = vmatprep.subr.mxu0 0.0
        %1153 = vmatpush1.msra.mxu0 0.0
        %1154 = vmatprep.subr.mxu0 0.0
        %1155 = vmatpush1.msra.mxu0 0.0
        %1156 = vmatprep.subr.mxu0 0.0
        %1157 = vmatpush1.msra.mxu0 0.0
        %1158 = vmatprep.subr.mxu0 0.0
        %1159 = vmatpush1.msra.mxu0 0.0
        %1160 = vmatprep.subr.mxu0 0.0
        %1161 = vmatpush1.msra.mxu0 0.0
        %1162 = vmatprep.subr.mxu0 0.0
        %1163 = vmatpush1.msra.mxu0 0.0
        %1164 = vmatprep.subr.mxu0 0.0
        %1165 = vmatpush1.msra.mxu0 0.0
        %1166 = vmatprep.subr.mxu0 0.0
        %1167 = vmatpush1.msra.mxu0 0.0
        %1168 = vmatprep.subr.mxu0 0.0
        %1169 = vmatpush1.msra.mxu0 0.0
        %1170 = vmatprep.subr.mxu0 0.0
        %1171 = vmatpush1.msra.mxu0 0.0
        %1172 = vmatprep.subr.mxu0 0.0
        %1173 = vmatpush1.msra.mxu0 0.0
        %1174 = vmatprep.mubr.f32.mxu0 0.0
        %v1175 = vand.u32 %v730, 4294901760
        %1176 = vmatmul.mubr.f32.gmra.mrb[0].mxu0 %v1175
        %v1177 = vpop.f32.mrb[0].mxu0
        %v1178 = vadd.f32 %v1106, %v1177
        %v1179 = vpop.f32.mrb[0].mxu0
        %1180 = vdwg.mxu0
        %v1181 = vxor.u32 %v1178, 2147483648
        %v1182 = vmul.f32 %v1181, 1.442695
        %v1183 = vpow.pop %v1182
        %v1184 = vadd.f32 %v1183, 1.0
        %v1185 = vrcp.pop %v1184
        %v1186 = vmul.f32 1.0, %v1185
        %v1187 = vlaneseq
        %v1188 = vshrl.u32 %v1187, 7
        %v1189 = vsub.s32 0, %v1188
        %v1190 = vrot.slane %v1186, %v1189
        %1192 = vbcast.lane.b32.xlu0 %v1190, 256
        %v1193 = vpop.permute.xlu0 %1192
        %v1196 = vunpack.c.l.s4 839922192
        %v1197 = vunpack.c.0.s8 %v1196
        %v1198 = vlaneseq
        %v1199 = vshrl.u32 %v1198, 7
        %v1200 = vsub.s32 %v1197, %v1199
        %v1201 = vrot.slane %v1193, %v1200
        %v1203 = vmul.f32 %v254, %v1201
        %1204 = vst [vmem:[%s253] sm:$0xff] %v1203
        %s1205 = sand.u32 %s141, 1
        %s1206 = scalar_lea.sflag [#allocation4], %s1205
        %s1207 = sand.u32 %s141, 1
        %s1208 = smul.addr %s1207, 8
        %s1209 = scalar_lea.vmem [#allocation7], %s1208
        // Predicated region
        $region49: #{tpu_custom_call.1} parent=39 // pred_check
          %p1210 = pneg %p151
        $region50: #{tpu_custom_call.1} parent=39 // pred_check_branch
          %1212 = sbr.rel (%p1210) target = $region52
        $region51: #{tpu_custom_call.1} parent=39 // pred_region
          %s1214 = ssub.s32 128, 128
          %1215 = vsyncadd %s1206, %s1214
          %s1216 = smul.addr %s23, 2
          %s1217 = smul.addr %s1216, 64
          %s1218 = scalar_lea.hbm %s5, %s1217
          %s1220 = sshll.u32 %s1209, 4
          %s1221 = int_to_ptr.vmem [resolvable:$true] %s1220
          %1223 = dma.vmem_to_hbm [thread:$0]  %s1221, 128, %s1218, %s1206
        $region52: #{tpu_custom_call.1} parent=39 // pred_fallthru
          _
      $region40: #{tpu_custom_call.1} parent=5 // pred_fallthru
        _
      %p1224 = scmp.le.s32.totalorder 2, %s18
      // Predicated region
      $region53: #{tpu_custom_call.1} parent=5 // pred_check
        %p1225 = pneg %p1224
      $region54: #{tpu_custom_call.1} parent=5 // pred_check_branch
        %1227 = sbr.rel (%p1225) target = $region56
      $region55: #{tpu_custom_call.1} parent=5 // pred_region
        %s1228 = ssub.s32 %s18, 2
        // Predicated region
        $region57: #{tpu_custom_call.1} parent=55 // pred_check
          %p1229 = pneg %p157
        $region58: #{tpu_custom_call.1} parent=55 // pred_check_branch
          %1231 = sbr.rel (%p1229) target = $region60
        $region59: #{tpu_custom_call.1} parent=55 // pred_region
          %s1232 = sand.u32 %s142, 1
          %s1233 = scalar_lea.sflag [#allocation4], %s1232
          %s1234 = sand.u32 %s142, 1
          %s1235 = smul.addr %s1234, 8
          %s1236 = scalar_lea.vmem [#allocation7], %s1235
          %1237 = dma.done %s1233, 128
        $region60: #{tpu_custom_call.1} parent=55 // pred_fallthru
          _
      $region56: #{tpu_custom_call.1} parent=5 // pred_fallthru
        _
    $region6: #{tpu_custom_call.1} parent=1 // loop_footer
      %s22 = sadd.s32 1, %s18
    $region7: #{tpu_custom_call.1} parent=1 // loop_footer_branch
      %17 = sbr.rel target = $region3
    $region8: #{tpu_custom_call.1} parent=1 // loop_exit
      _
    %1238 = vsyncpa [#allocation3], 1
    %s1239 = scalar_lea.sflag [#allocation3], 1
    %1240 = vsyncpa %s1239, 1
    %1241 = vsyncpa [#allocation6], 1
    %1242 = vsyncpa [#allocation4], 1
    %s1243 = scalar_lea.sflag [#allocation4], 1
    %1244 = vsyncpa %s1243, 1

</llo_original>
